<compile_context>
chip_gen: v5e
topology: v5e:2x2
jax: 0.10.0
libtpu: 0.0.40
codegen_flags: <defaults>
</compile_context>

<pallas_src>
import jax
import jax.numpy as jnp
from jax.experimental import pallas as pl
from jax.experimental.pallas import tpu as pltpu


def _conv1x1_sub_kernel(x_ref, w_ref, b_ref, o_ref):
    # x_ref: (Cin, P)  VMEM, lane-dense
    # w_ref: (Cin, 1)  VMEM (broadcasts along lanes)
    # b_ref: (1, 1)    SMEM scalar = bias - 1.5
    # o_ref: (1, P)    VMEM, lane-dense
    x = x_ref[...].astype(jnp.float32)
    w = w_ref[...].astype(jnp.float32)
    # VPU multiply + XLU sublane reduce: true f32, no MXU push/drain latency for M=1, K=32.
    acc = jnp.sum(x * w, axis=0, keepdims=True)
    o_ref[...] = (acc + b_ref[0, 0]).astype(o_ref.dtype)


def conv1x1_sub(x_nchw, weight, bias):
    """x_nchw: (N, Cin, H, W); weight: (Cout=1, Cin, 1, 1); bias: (Cout=1,)"""
    N, Cin, H, W = x_nchw.shape
    Cout = weight.shape[0]
    assert Cout == 1, "Model spec has Cout == 1"

    HW = H * W
    # Guard: keep the lane (last) dim a multiple of 128 so stores stay unmasked vst.
    HW_pad = ((HW + 127) // 128) * 128

    w_col = weight.reshape(Cin, 1)                                  # (Cin, 1)
    b_scalar = (bias.astype(jnp.float32) - 1.5).reshape(1, 1)       # fold the -1.5 here

    P_total = N * HW_pad
    cost = pl.CostEstimate(
        flops=2 * Cin * P_total,
        transcendentals=0,
        bytes_accessed=4 * (Cin * P_total + P_total + Cin + 1),
    )

    if N == 1:
        # Grid-less single block: whole problem (~33 KiB) trivially fits VMEM on all gens.
        x_cp = x_nchw.reshape(Cin, HW)                              # pure view for N == 1
        if HW_pad != HW:
            x_cp = jnp.pad(x_cp, ((0, 0), (0, HW_pad - HW)))
        out_row = pl.pallas_call(
            _conv1x1_sub_kernel,
            out_shape=jax.ShapeDtypeStruct((1, HW_pad), x_nchw.dtype),
            in_specs=[
                pl.BlockSpec(memory_space=pltpu.MemorySpace.VMEM),   # x   (Cin, HW_pad)
                pl.BlockSpec(memory_space=pltpu.MemorySpace.VMEM),   # w   (Cin, 1)
                pl.BlockSpec(memory_space=pltpu.MemorySpace.SMEM),   # bias scalar
            ],
            out_specs=pl.BlockSpec(memory_space=pltpu.MemorySpace.VMEM),
            cost_estimate=cost,
        )(x_cp, w_col, b_scalar)
        return out_row[:, :HW].reshape(1, 1, H, W)

    # N > 1: grid over batch on the native (N, Cin, HW) view — no HBM transpose.
    x_v = x_nchw.reshape(N, Cin, HW)
    if HW_pad != HW:
        x_v = jnp.pad(x_v, ((0, 0), (0, 0), (0, HW_pad - HW)))

    # Only shard across TensorCores (v7x) when there is enough work per core.
    sem = "parallel" if N * HW_pad >= (1 << 17) else "arbitrary"

    out = pl.pallas_call(
        _conv1x1_sub_kernel,
        out_shape=jax.ShapeDtypeStruct((N, 1, HW_pad), x_nchw.dtype),
        grid=(N,),
        in_specs=[
            pl.BlockSpec((pl.Squeezed(), Cin, HW_pad), lambda n: (n, 0, 0)),  # x per batch
            pl.BlockSpec((Cin, 1), lambda n: (0, 0)),                          # w (resident)
            pl.BlockSpec((1, 1), lambda n: (0, 0),
                         memory_space=pltpu.MemorySpace.SMEM),                 # bias scalar
        ],
        out_specs=pl.BlockSpec((pl.Squeezed(), 1, HW_pad), lambda n: (n, 0, 0)),
        compiler_params=pltpu.CompilerParams(dimension_semantics=(sem,)),
        cost_estimate=cost,
    )(x_v, w_col, b_scalar)

    return out[:, :, :HW].reshape(N, 1, H, W)


def _reference(x, weight, bias):
    Cout, Cin = weight.shape[0], weight.shape[1]
    return (jnp.einsum('nchw,oc->nohw', x, weight.reshape(Cout, Cin))
            + bias.reshape(1, Cout, 1, 1) - 1.5)


if __name__ == "__main__":
    key = jax.random.PRNGKey(0)
    k_x, k_w, k_b, k_x2 = jax.random.split(key, 4)

    # Shapes implied by the module spec: x = torch.randn(1, 32, 16, 16)
    N, Cin, H, W = 1, 32, 16, 16
    Cout = 1

    x = jax.random.normal(k_x, (N, Cin, H, W), dtype=jnp.float32)

    # Deterministic parameter init mimicking PyTorch Conv2d default:
    # uniform(-1/sqrt(fan_in), 1/sqrt(fan_in)), fan_in = Cin * 1 * 1
    bound = 1.0 / jnp.sqrt(jnp.float32(Cin))
    weight = jax.random.uniform(k_w, (Cout, Cin, 1, 1), dtype=jnp.float32,
                                minval=-bound, maxval=bound)
    bias = jax.random.uniform(k_b, (Cout,), dtype=jnp.float32,
                              minval=-bound, maxval=bound)

    out = jax.block_until_ready(conv1x1_sub(x, weight, bias))
    ref = _reference(x, weight, bias)
    assert out.shape == (N, Cout, H, W)
    assert jnp.allclose(out, ref, atol=1e-5, rtol=1e-5)

    # Also exercise the transpose-free batched (gridded) path.
    x2 = jax.random.normal(k_x2, (2, Cin, H, W), dtype=jnp.float32)
    out2 = jax.block_until_ready(conv1x1_sub(x2, weight, bias))
    ref2 = _reference(x2, weight, bias)
    assert out2.shape == (2, Cout, H, W)
    assert jnp.allclose(out2, ref2, atol=1e-5, rtol=1e-5)

    print("KERNEL_OK")
</pallas_src>

<mosaic_0001>
module attributes {stable_mosaic.version = 11 : i64} {
  func.func @_conv1x1_sub_kernel(%arg0: memref<32x256xf32, #tpu.memory_space<vmem>>, %arg1: memref<32x1xf32, #tpu.memory_space<vmem>>, %arg2: memref<1x1xf32, #tpu.memory_space<smem>>, %arg3: memref<1x256xf32, #tpu.memory_space<vmem>>) attributes {dimension_semantics = [], scalar_prefetch = 0 : i64, scratch_operands = 0 : i64, tpu.core_type = #tpu.core_type<tc>} {
    %c0 = arith.constant 0 : index
    %c0_0 = arith.constant 0 : index
    %0 = vector.load %arg0[%c0, %c0_0] : memref<32x256xf32, #tpu.memory_space<vmem>>, vector<32x256xf32>
    %c0_1 = arith.constant 0 : index
    %c0_2 = arith.constant 0 : index
    %1 = vector.load %arg1[%c0_1, %c0_2] : memref<32x1xf32, #tpu.memory_space<vmem>>, vector<32x1xf32>
    %2 = vector.broadcast %1 : vector<32x1xf32> to vector<32x256xf32>
    %3 = arith.mulf %0, %2 : vector<32x256xf32>
    %cst = arith.constant dense<0.000000e+00> : vector<256xf32>
    %4 = vector.multi_reduction <add>, %3, %cst [0] : vector<32x256xf32> to vector<256xf32>
    %5 = vector.shape_cast %4 : vector<256xf32> to vector<1x256xf32>
    %c0_3 = arith.constant 0 : index
    %c0_4 = arith.constant 0 : index
    %6 = memref.load %arg2[%c0_3, %c0_4] : memref<1x1xf32, #tpu.memory_space<smem>>
    %7 = vector.broadcast %6 : f32 to vector<1x256xf32>
    %8 = arith.addf %5, %7 : vector<1x256xf32>
    %c0_5 = arith.constant 0 : index
    %c0_6 = arith.constant 0 : index
    %9 = vector.load %arg3[%c0_5, %c0_6] : memref<1x256xf32, #tpu.memory_space<vmem>>, vector<1x256xf32>
    tpu.vector_store %arg3[%c0_5, %c0_6], %8 {strides = array<i32>} : memref<1x256xf32, #tpu.memory_space<vmem>>, vector<1x256xf32>,
    return
  }
}

</mosaic_0001>

<llo_original>
// kernel: tpu_custom_call.1
$region0: #{tpu_custom_call.1}
  #allocation0 [shape = 'u32[]', space=smem, size = 0x4, offset = 0x4, fixed_abs, tag = 'smem constant byte address 0x4 - core index']
  #allocation1 [shape = 'u32[72,128]{1,0:T(1,128)}', space=vmem, size = 0x9000, scoped, tag = 'internal scratch']
  #allocation2 [shape = 'f32[1,1]{1,0:T(1,128)S(6)}', space=smem, size = 0x200, scoped, tag = 'scoped memory for tpu_custom_call.1']
  %s0 = inlined_call_operand.hbm [shape: f32[32,256], index: 0, kind: input, shape index: {}]
  %s1 = inlined_call_operand.vmem [shape: f32[32,1], index: 1, kind: input, shape index: {}]
  %s2 = inlined_call_operand.<no memory space> [shape: f32[1,1], index: 2, kind: input, shape index: {}]
  %s3 = inlined_call_operand.hbm [shape: f32[1,256], index: 3, kind: output, shape index: {}]
  %s4 = sld [smem:[#allocation0]]
  $region26: #{tpu_custom_call.1} parent=0
    _
  %s6 = ssub.s32 1, %s4
  %s7 = scalar_select 0, %s6, %s4
  %8 = sst [smem:[#allocation2]] %s2
  $region1: #{tpu_custom_call.1} parent=0
    #allocation3 [shape = 'u8[32768]{0}', space=vmem, size = 0x8000, scoped, tag = 'input window, operand 0, single buffered']
    #allocation4 [shape = 's32[1]{0}', space=sflag, size = 0x4, scoped, tag = 'scoped memory for tpu_custom_call.1']
    #allocation5 [shape = 's32[1]{0}', space=sflag, size = 0x4, scoped, tag = 'scoped memory for tpu_custom_call.1']
    #allocation6 [shape = 'u8[1024]{0}', space=vmem, size = 0x400, scoped, tag = 'output window, operand 0, single buffered']
    %9 = vsyncpa [#allocation4], 0
    %10 = vsyncpa [#allocation5], 0
    // Predicated region
    $region2: #{tpu_custom_call.1} parent=1 // pred_check
      _
    $region3: #{tpu_custom_call.1} parent=1 // pred_check_branch
      %12 = sbr.rel (0) target = $region5
    $region4: #{tpu_custom_call.1} parent=1 // pred_region
      %14 = vsyncadd [#allocation4], 0
      %s15 = sshll.u32 %s0, 4
      %s16 = int_to_ptr.hbm [resolvable:$true] %s15
      %s17 = sshll.u32 [#allocation3], 4
      %s18 = int_to_ptr.vmem [resolvable:$true] %s17
      %23 = dma.hbm_to_vmem [thread:$0]  %s16, 1024, %s18, [#allocation4], 256, 256, 16
    $region5: #{tpu_custom_call.1} parent=1 // pred_fallthru
      _
    // Predicated region
    $region6: #{tpu_custom_call.1} parent=1 // pred_check
      _
    $region7: #{tpu_custom_call.1} parent=1 // pred_check_branch
      %25 = sbr.rel (0) target = $region9
    $region8: #{tpu_custom_call.1} parent=1 // pred_region
      _
    $region9: #{tpu_custom_call.1} parent=1 // pred_fallthru
      _
    // Predicated region
    $region10: #{tpu_custom_call.1} parent=1 // pred_check
      _
    $region11: #{tpu_custom_call.1} parent=1 // pred_check_branch
      %27 = sbr.rel (0) target = $region13
    $region12: #{tpu_custom_call.1} parent=1 // pred_region
      _
    $region13: #{tpu_custom_call.1} parent=1 // pred_fallthru
      _
    // Predicated region
    $region14: #{tpu_custom_call.1} parent=1 // pred_check
      _
    $region15: #{tpu_custom_call.1} parent=1 // pred_check_branch
      %29 = sbr.rel (0) target = $region17
    $region16: #{tpu_custom_call.1} parent=1 // pred_region
      %31 = dma.done [#allocation4], 1024
    $region17: #{tpu_custom_call.1} parent=1 // pred_fallthru
      _
    %v32 = vld [vmem:[#allocation3] sm:$0xff]
    %v33 = vld [vmem:[#allocation3 + $0x8] sm:$0xff]
    %v34 = vld [vmem:[#allocation3 + $0x10] sm:$0xff]
    %v35 = vld [vmem:[#allocation3 + $0x18] sm:$0xff]
    %v36 = vld [vmem:[#allocation3 + $0x20] sm:$0xff]
    %v37 = vld [vmem:[#allocation3 + $0x28] sm:$0xff]
    %v38 = vld [vmem:[#allocation3 + $0x30] sm:$0xff]
    %v39 = vld [vmem:[#allocation3 + $0x38] sm:$0xff]
    %v40 = vld [vmem:[%s1] sm:$0xff]
    %v41 = vld [vmem:[%s1 + $0x8] sm:$0xff]
    %v42 = vld [vmem:[%s1 + $0x10] sm:$0xff]
    %v43 = vld [vmem:[%s1 + $0x18] sm:$0xff]
    %45 = vset.pattern.permute.xlu0 0
    %46 = vperm.xlu0 %45, %v40
    %v47 = vpop.permute.xlu0 %46
    %50 = vset.pattern.permute.xlu0 0
    %51 = vperm.xlu0 %50, %v41
    %v52 = vpop.permute.xlu0 %51
    %55 = vset.pattern.permute.xlu0 0
    %56 = vperm.xlu0 %55, %v42
    %v57 = vpop.permute.xlu0 %56
    %60 = vset.pattern.permute.xlu0 0
    %61 = vperm.xlu0 %60, %v43
    %v62 = vpop.permute.xlu0 %61
    %v64 = vmul.f32 %v32, %v47
    %v65 = vmul.f32 %v33, %v47
    %v66 = vmul.f32 %v34, %v52
    %v67 = vmul.f32 %v35, %v52
    %v68 = vmul.f32 %v36, %v57
    %v69 = vmul.f32 %v37, %v57
    %v70 = vmul.f32 %v38, %v62
    %v71 = vmul.f32 %v39, %v62
    %v72 = vadd.f32 %v64, %v66
    %v73 = vadd.f32 %v72, %v68
    %v74 = vadd.f32 %v73, %v70
    %v75 = vrot.slane %v74, 4
    %v76 = vadd.f32 %v74, %v75
    %v77 = vrot.slane %v76, 2
    %v78 = vadd.f32 %v76, %v77
    %v79 = vrot.slane %v78, 1
    %v80 = vadd.f32 %v78, %v79
    %v81 = vadd.f32 %v65, %v67
    %v82 = vadd.f32 %v81, %v69
    %v83 = vadd.f32 %v82, %v71
    %v84 = vrot.slane %v83, 4
    %v85 = vadd.f32 %v83, %v84
    %v86 = vrot.slane %v85, 2
    %v87 = vadd.f32 %v85, %v86
    %v88 = vrot.slane %v87, 1
    %v89 = vadd.f32 %v87, %v88
    %s90 = sld [smem:[#allocation2]]
    %v91 = vstv %s90
    %v92 = vadd.f32 %v80, %v91
    %v93 = vadd.f32 %v89, %v91
    %v96 = vrot.slane %v93, 7
    %vm97 = vcmask 1040384
    %v98 = vsel %vm97, %v92, %v96
    %v100 = vlaneseq
    %vm101 = vcmp.ge.s32.totalorder %v100, 0
    %vm102 = vcmp.lt.s32.totalorder %v100, 256
    %vm103 = vmand %vm101, %vm102
    %104 = vst.msk [vmem:[#allocation6] sm:$0x3] %vm103, %v98
    // Predicated region
    $region18: #{tpu_custom_call.1} parent=1 // pred_check
      _
    $region19: #{tpu_custom_call.1} parent=1 // pred_check_branch
      %106 = sbr.rel (0) target = $region21
    $region20: #{tpu_custom_call.1} parent=1 // pred_region
      %108 = vsyncadd [#allocation5], 0
      %s110 = sshll.u32 [#allocation6], 4
      %s111 = int_to_ptr.vmem [resolvable:$true] %s110
      %s112 = sshll.u32 %s3, 4
      %s113 = int_to_ptr.hbm [resolvable:$true] %s112
      %115 = dma.vmem_to_hbm [thread:$0]  %s111, 32, %s113, [#allocation5]
    $region21: #{tpu_custom_call.1} parent=1 // pred_fallthru
      _
    // Predicated region
    $region22: #{tpu_custom_call.1} parent=1 // pred_check
      _
    $region23: #{tpu_custom_call.1} parent=1 // pred_check_branch
      %117 = sbr.rel (0) target = $region25
    $region24: #{tpu_custom_call.1} parent=1 // pred_region
      %119 = dma.done [#allocation5], 32
    $region25: #{tpu_custom_call.1} parent=1 // pred_fallthru
      _
    %120 = vsyncpa [#allocation4], 1
    %121 = vsyncpa [#allocation5], 1

</llo_original>
